<compile_context>
chip_gen: v7x
topology: tpu7x:2x2x1
jax: 0.10.0
libtpu: 0.0.40
codegen_flags: <defaults>
</compile_context>

<pallas_src>
import jax
import jax.numpy as jnp
from jax.experimental import pallas as pl
from jax.experimental.pallas import tpu as pltpu

_LANE = 128
_SUB = 32  # row alignment covering f32(8) / bf16(16) / int8(32) sublane packing


def _silu_kernel(x_ref, o_ref):
    xf = x_ref[...].astype(jnp.float32)
    # x * sigmoid(x).  exp lands on the EUP slot; the single divide per element
    # is a few VALU ops and fully hidden under the HBM-bound DMA traffic.
    # (pl.reciprocal(1 + e, approx=True) would route it to the EUP too, but at
    # ~1e-3 relative error; we keep exact forward semantics instead.)
    e = jnp.exp(-xf)
    o_ref[...] = (xf / (1.0 + e)).astype(o_ref.dtype)


def silu_pallas(x: jax.Array, *, tile_elems: int = 1 << 20) -> jax.Array:
    """Elementwise x * sigmoid(x) (SiLU) via a Pallas TPU kernel.

    Flattens to a lane-dense (rows, width) slab (width in {1024,512,256,128})
    and streams it through a tiled, double-buffered elementwise pass.
    `tile_elems` is the per-block element budget (default 1M = 4 MiB f32).
    """
    orig_shape = x.shape
    dtype = x.dtype
    if not jnp.issubdtype(dtype, jnp.floating):
        raise TypeError(f"silu_pallas expects a floating dtype, got {dtype}")
    n = x.size
    if n == 0:
        return x

    flat = x.reshape(-1)
    # Pad only up to a lane multiple (128). Ragged row counts relative to the
    # tile are handled by the cdiv grid + edge masking, so any coarser padding
    # would just add full HBM read+write passes (jnp.pad and out[:n]).
    n_padded = ((n + _LANE - 1) // _LANE) * _LANE
    pad = n_padded - n
    if pad:
        flat = jnp.pad(flat, (0, pad))

    # Widest lane-dense slab that divides the (padded) length.
    width = _LANE
    for w in (1024, 512, 256, _LANE):
        if n_padded % w == 0:
            width = w
            break
    rows = n_padded // width
    x2 = flat.reshape(rows, width)

    if rows < 2 * _SUB:
        # Tiny input: one full-extent block (block_shape == array shape is
        # always legal, regardless of (8,128) alignment).
        tr = rows
    else:
        # ~tile_elems elements per block, rounded to a 32-row multiple so all
        # interior blocks stay on full (8/16/32, 128) tiles (unmasked stores).
        tr = max(_SUB, (tile_elems // width) // _SUB * _SUB)
        # Cap so the grid has >= 2 blocks: both v7x TensorCores get work under
        # the "parallel" semantics and the pipeline has something to overlap.
        half = max(_SUB, (rows // 2) // _SUB * _SUB)
        tr = min(tr, half)

    grid = (pl.cdiv(rows, tr),)
    itemsize = jnp.dtype(dtype).itemsize
    block_bytes = tr * width * itemsize
    # in + out, double-buffered (4x block) + headroom; capped at 48 MiB so it
    # is safe on v7x's 64 MiB-per-TC VMEM as well as v5e/v6e.
    vmem_limit = int(min(48 * 2**20, max(16 * 2**20, 6 * block_bytes)))

    out = pl.pallas_call(
        _silu_kernel,
        out_shape=jax.ShapeDtypeStruct((rows, width), dtype),
        grid_spec=pl.GridSpec(
            grid=grid,
            in_specs=[pl.BlockSpec((tr, width), lambda i: (i, 0))],
            out_specs=pl.BlockSpec((tr, width), lambda i: (i, 0)),
        ),
        compiler_params=pltpu.CompilerParams(
            dimension_semantics=("parallel",),
            vmem_limit_bytes=vmem_limit,
        ),
        cost_estimate=pl.CostEstimate(
            flops=4 * n_padded,
            transcendentals=n_padded,
            bytes_accessed=2 * n_padded * itemsize,
        ),
    )(x2)

    out_flat = out.reshape(-1)
    if pad:
        out_flat = out_flat[:n]
    return out_flat.reshape(orig_shape)


if __name__ == "__main__":
    key = jax.random.PRNGKey(0)

    # NCHW feature map, matching the typical conv-block input this module sees.
    x = jax.random.normal(key, (2, 4, 16, 16), dtype=jnp.float32)
    y = jax.block_until_ready(silu_pallas(x))
    y_ref = x * jax.nn.sigmoid(x)
    assert y.shape == x.shape and y.dtype == x.dtype
    assert jnp.allclose(y, y_ref, atol=1e-6, rtol=1e-6)

    # Non-multiple-of-128 size: exercises the pad/slice fallback path.
    x_odd = jax.random.normal(jax.random.PRNGKey(1), (3, 5, 7, 11), dtype=jnp.float32)
    y_odd = jax.block_until_ready(silu_pallas(x_odd))
    assert jnp.allclose(y_odd, x_odd * jax.nn.sigmoid(x_odd), atol=1e-6, rtol=1e-6)

    # Moderate size: exercises the multi-block (grid >= 2) pipelined path.
    x_big = jax.random.normal(jax.random.PRNGKey(2), (2, 64, 32, 32), dtype=jnp.float32)
    y_big = jax.block_until_ready(silu_pallas(x_big))
    assert jnp.allclose(y_big, x_big * jax.nn.sigmoid(x_big), atol=1e-6, rtol=1e-6)

    print("KERNEL_OK")
</pallas_src>

<mosaic_0001>
module attributes {stable_mosaic.version = 11 : i64} {
  func.func @_silu_kernel(%arg0: i32, %arg1: memref<2x1024xf32, #tpu.memory_space<vmem>>, %arg2: memref<2x1024xf32, #tpu.memory_space<vmem>>) attributes {dimension_semantics = [#tpu.dimension_semantics<parallel>], iteration_bounds = array<i64: 1>, scalar_prefetch = 0 : i64, scratch_operands = 0 : i64, tpu.core_type = #tpu.core_type<tc>, window_params = [{transform_indices = @transform_0, window_bounds = array<i64: 2, 1024>}, {transform_indices = @transform_1, window_bounds = array<i64: 2, 1024>}]} {
    %c0 = arith.constant 0 : index
    %c0_0 = arith.constant 0 : index
    %0 = vector.load %arg1[%c0, %c0_0] : memref<2x1024xf32, #tpu.memory_space<vmem>>, vector<2x1024xf32>
    %cst = arith.constant 0.000000e+00 : f32
    %1 = vector.broadcast %cst : f32 to vector<2x1024xf32>
    %2 = arith.subf %1, %0 : vector<2x1024xf32>
    %3 = math.exp %2 : vector<2x1024xf32>
    %cst_1 = arith.constant 1.000000e+00 : f32
    %4 = vector.broadcast %cst_1 : f32 to vector<2x1024xf32>
    %5 = arith.addf %4, %3 : vector<2x1024xf32>
    %6 = arith.divf %0, %5 : vector<2x1024xf32>
    %c0_2 = arith.constant 0 : index
    %c0_3 = arith.constant 0 : index
    %7 = vector.load %arg2[%c0_2, %c0_3] : memref<2x1024xf32, #tpu.memory_space<vmem>>, vector<2x1024xf32>
    tpu.vector_store %arg2[%c0_2, %c0_3], %6 {strides = array<i32>} : memref<2x1024xf32, #tpu.memory_space<vmem>>, vector<2x1024xf32>,
    return
  }
  func.func @transform_0(%arg0: i32) -> (i32, i32) {
    %c0_i32 = arith.constant 0 : i32
    %c0_i32_0 = arith.constant 0 : i32
    return %arg0, %c0_i32 : i32, i32
  }
  func.func @transform_1(%arg0: i32) -> (i32, i32) {
    %c0_i32 = arith.constant 0 : i32
    %c0_i32_0 = arith.constant 0 : i32
    return %arg0, %c0_i32 : i32, i32
  }
}

</mosaic_0001>

<llo_original>
// kernel: tpu_custom_call.1
$region0: #{tpu_custom_call.1}
  #allocation0 [shape = 'u32[]', space=smem, size = 0x4, offset = 0x4, fixed_abs, tag = 'smem constant byte address 0x4 - core index']
  #allocation1 [shape = 'u32[144,128]{1,0:T(1,128)}', space=vmem, size = 0x12000, scoped, tag = 'internal scratch']
  %s0 = inlined_call_operand.hbm [shape: f32[2,1024], index: 0, kind: input, shape index: {}]
  %s1 = inlined_call_operand.hbm [shape: f32[2,1024], index: 1, kind: output, shape index: {}]
  %s2 = sld [smem:[#allocation0]]
  $region18: #{tpu_custom_call.1} parent=0
    _
  %s4 = ssub.s32 1, %s2
  %s5 = scalar_select 0, %s4, %s2
  $region1: #{tpu_custom_call.1} parent=0
    #allocation2 [shape = 'u8[8192]{0}', space=vmem, size = 0x2000, scoped, tag = 'input window, operand 0, single buffered']
    #allocation3 [shape = 's32[1]{0}', space=sflag, size = 0x4, scoped, tag = 'scoped memory for tpu_custom_call.1']
    #allocation4 [shape = 's32[1]{0}', space=sflag, size = 0x4, scoped, tag = 'scoped memory for tpu_custom_call.1']
    #allocation5 [shape = 'u8[8192]{0}', space=vmem, size = 0x2000, scoped, tag = 'output window, operand 0, single buffered']
    %6 = vsyncpa [#allocation3], 0
    %7 = vsyncpa [#allocation4], 0
    // Predicated region
    $region2: #{tpu_custom_call.1} parent=1 // pred_check
      _
    $region3: #{tpu_custom_call.1} parent=1 // pred_check_branch
      %9 = sbr.rel (0) target = $region5
    $region4: #{tpu_custom_call.1} parent=1 // pred_region
      %s11 = ssub.s32 256, 256
      %12 = vsyncadd [#allocation3], %s11
      %s14 = sshll.u32 [#allocation2], 4
      %s15 = int_to_ptr.vmem [resolvable:$true] %s14
      %17 = dma.hbm_to_vmem [thread:$0]  %s0, 256, %s15, [#allocation3]
    $region5: #{tpu_custom_call.1} parent=1 // pred_fallthru
      _
    // Predicated region
    $region6: #{tpu_custom_call.1} parent=1 // pred_check
      _
    $region7: #{tpu_custom_call.1} parent=1 // pred_check_branch
      %19 = sbr.rel (0) target = $region9
    $region8: #{tpu_custom_call.1} parent=1 // pred_region
      %20 = dma.done [#allocation3], 256
    $region9: #{tpu_custom_call.1} parent=1 // pred_fallthru
      _
    %v21 = vld [vmem:[#allocation2] sm:$0xff]
    %v22 = vld [vmem:[#allocation2 + $0x8] sm:$0xff]
    %v23 = vsub.f32 0.0, %v21
    %v24 = vsub.f32 0.0, %v22
    %v25 = vmul.f32 %v23, 1.442695
    %v26 = vpow.pop %v25
    %v27 = vmul.f32 %v24, 1.442695
    %v28 = vpow.pop %v27
    %v29 = vadd.f32 %v26, 1.0
    %v30 = vadd.f32 %v28, 1.0
    %v31 = vrcp.pop %v29
    %v32 = vmul.f32 %v21, %v31
    %v33 = vrcp.pop %v30
    %v34 = vmul.f32 %v22, %v33
    %35 = vst [vmem:[#allocation5] sm:$0xff] %v32
    %36 = vst [vmem:[#allocation5 + $0x8] sm:$0xff] %v34
    // Predicated region
    $region10: #{tpu_custom_call.1} parent=1 // pred_check
      _
    $region11: #{tpu_custom_call.1} parent=1 // pred_check_branch
      %38 = sbr.rel (0) target = $region13
    $region12: #{tpu_custom_call.1} parent=1 // pred_region
      %s40 = ssub.s32 256, 256
      %41 = vsyncadd [#allocation4], %s40
      %s43 = sshll.u32 [#allocation5], 4
      %s44 = int_to_ptr.vmem [resolvable:$true] %s43
      %46 = dma.vmem_to_hbm [thread:$0]  %s44, 256, %s1, [#allocation4]
    $region13: #{tpu_custom_call.1} parent=1 // pred_fallthru
      _
    // Predicated region
    $region14: #{tpu_custom_call.1} parent=1 // pred_check
      _
    $region15: #{tpu_custom_call.1} parent=1 // pred_check_branch
      %48 = sbr.rel (0) target = $region17
    $region16: #{tpu_custom_call.1} parent=1 // pred_region
      %49 = dma.done [#allocation4], 256
    $region17: #{tpu_custom_call.1} parent=1 // pred_fallthru
      _
    %50 = vsyncpa [#allocation3], 1
    %51 = vsyncpa [#allocation4], 1

</llo_original>
